<compile_context>
chip_gen: v6e
topology: v6e:2x2x1
jax: 0.10.0
libtpu: 0.0.40
codegen_flags: <defaults>
</compile_context>

<pallas_src>
import math

import jax
import jax.numpy as jnp
from jax import lax
from jax.experimental import pallas as pl
from jax.experimental.pallas import tpu as pltpu


DST_TILE = 128            # destination-node tile (lane axis); v6e (128 MiB VMEM) can use 256
SRC_TILE = 128            # source-node tile for the flash-style online softmax
NODE_TILE = 128           # node tile for the projection / BN+ReLU kernels
VMEM_LIMIT = 32 * 1024 * 1024   # explicit scoped-VMEM cap (safe on v5e/v6e/v7x)


def _round_up(n, m):
    return ((n + m - 1) // m) * m


# --------------------------------------------------------------------------------------
# Kernels
# --------------------------------------------------------------------------------------
def _proj_kernel(wqkv_ref, bqkv_ref, wskip_ref, bskip_ref, x_ref, qkv_ref, skip_ref):
    """Fused lin_query/key/value (bf16 out) + lin_skip (f32 out) for one node tile."""
    xb = x_ref[...].astype(jnp.bfloat16)
    qkv = jnp.dot(wqkv_ref[...], xb, preferred_element_type=jnp.float32) + bqkv_ref[...]
    qkv_ref[...] = qkv.astype(jnp.bfloat16)
    skip_ref[...] = (jnp.dot(wskip_ref[...], xb, preferred_element_type=jnp.float32)
                     + bskip_ref[...])


def _attn_kernel(q_ref, k_ref, v_ref, skip_ref, we_ref, adj_ref, ea_ref, out_ref,
                 m_sc, l_sc, acc_sc):
    """One (dst-tile, src-tile) step of PyG-style TransformerConv(edge_dim=...) w/ heads fused.

    Shapes (T = dst tile on lanes, S = src tile on sublanes, D = raw edge_dim):
      q_ref    (H, C, T)  bf16     k_ref / v_ref (H, C, S) bf16    skip_ref (H, C, T) f32
      we_ref   (D, H, C)  f32      lin_edge weight; edge term kept factored: e = ea @ we
      adj_ref  (S, T)     bf16     1 where an edge src->dst exists
      ea_ref   (D, S, T)  bf16     raw edge attributes, densified once, shared by all layers
      out_ref  (H, C, T)  f32      scratch: m_sc/l_sc (H,1,T) f32, acc_sc (H,C,T) f32
    """
    src_step = pl.program_id(1)

    @pl.when(src_step == 0)
    def _():
        m_sc[...] = jnp.full(m_sc.shape, -1e30, m_sc.dtype)
        l_sc[...] = jnp.zeros(l_sc.shape, l_sc.dtype)
        acc_sc[...] = jnp.zeros(acc_sc.shape, acc_sc.dtype)

    q = q_ref[...]                                   # (H, C, T) bf16
    qf = q.astype(jnp.float32)
    _, out_ch, _ = q.shape
    ndim_e = ea_ref.shape[0]
    scale = 1.0 / math.sqrt(out_ch)

    # scores s[h,s,t] = sum_c k[h,c,s] * q[h,c,t]  — one batched MXU matmul, all heads fused,
    # both operands lane-dense (contract the small C axis, never lane-pad it).
    s = lax.dot_general(k_ref[...], q, (((1,), (1,)), ((0,), (0,))),
                        preferred_element_type=jnp.float32)                # (H, S, T) f32

    # + factored edge term: sum_c q[h,c,t]*lin_edge(ea)[h,c,s,t] = sum_d (q . we[d]) * ea[d]
    # -> only D (=edge_dim) VPU passes over (H, S, T), streaming bf16 raw edge attrs.
    for d in range(ndim_e):
        qe_d = jnp.sum(we_ref[d][:, :, None] * qf, axis=1, keepdims=True)  # (H, 1, T)
        s = s + qe_d * ea_ref[d].astype(jnp.float32)[None]
    s = s * scale

    # masked ONLINE softmax over incoming edges (src / sublane axis): running max & denom.
    has_edge = adj_ref[...][None] > 0                                       # (1, S, T) bool
    masked = jnp.where(has_edge, s, jnp.float32(-1e30))
    m_old = m_sc[...]
    m_new = jnp.maximum(m_old, jnp.max(masked, axis=1, keepdims=True))      # (H, 1, T)
    corr = jnp.exp(m_old - m_new)
    # masking folded into a single select (no separate * adj pass); isolated dst -> p == 0.
    p = jnp.where(has_edge, jnp.exp(masked - m_new), 0.0)                   # (H, S, T)

    # aggregate values (batched MXU matmul) + factored edge features with unnormalised p.
    agg = lax.dot_general(v_ref[...], p.astype(v_ref.dtype),
                          (((2,), (1,)), ((0,), (0,))),
                          preferred_element_type=jnp.float32)               # (H, C, T)
    for d in range(ndim_e):
        r_d = jnp.sum(p * ea_ref[d].astype(jnp.float32)[None], axis=1)      # (H, T)
        agg = agg + we_ref[d][:, :, None] * r_d[:, None, :]                 # (H, C, T)

    l_sc[...] = corr * l_sc[...] + jnp.sum(p, axis=1, keepdims=True)
    acc_sc[...] = corr * acc_sc[...] + agg
    m_sc[...] = m_new

    @pl.when(src_step == pl.num_programs(1) - 1)
    def _():
        # nodes with no in-edges -> l == 0 -> output is just the skip connection.
        inv = pl.reciprocal(jnp.maximum(l_sc[...], 1e-16), approx=True)
        # single lane/sublane-dense (H, C, T) store (no per-channel masked vst.msk).
        out_ref[...] = acc_sc[...] * inv + skip_ref[...]


def _bn_relu_kernel(y_ref, scale_ref, shift_ref, o_ref):
    """BatchNorm apply (precomputed scale/shift) + ReLU on a lane-dense (HC, tile) block."""
    o_ref[...] = jnp.maximum(y_ref[...] * scale_ref[...] + shift_ref[...], 0.0)


# --------------------------------------------------------------------------------------
# Per-layer wrappers
# --------------------------------------------------------------------------------------
def transformer_conv(xT, adjT, eaT, p, nheads, out_ch):
    """One TransformerConv layer.  xT: (F, N_pad) f32 -> pre-BN y: (H*C, N_pad) f32."""
    feat, n_pad = xT.shape
    hc = nheads * out_ch

    wqkv = jnp.concatenate([p["wq"], p["wk"], p["wv"]], axis=1).T.astype(jnp.bfloat16)
    bqkv = jnp.concatenate([p["bq"], p["bk"], p["bv"]], axis=1).T            # (3HC, 1) f32
    wskip = p["wskip"].T.astype(jnp.bfloat16)                                # (HC, F)
    bskip = p["bskip"].T                                                     # (HC, 1) f32

    # ---- fused projections: Q/K/V written straight to bf16, skip to f32 ----
    qkv, skip = pl.pallas_call(
        _proj_kernel,
        out_shape=(jax.ShapeDtypeStruct((3 * hc, n_pad), jnp.bfloat16),
                   jax.ShapeDtypeStruct((hc, n_pad), jnp.float32)),
        grid=(n_pad // NODE_TILE,),
        in_specs=[
            pl.BlockSpec((3 * hc, feat), lambda i: (0, 0)),     # qkv weights resident
            pl.BlockSpec((3 * hc, 1), lambda i: (0, 0)),        # qkv bias resident
            pl.BlockSpec((hc, feat), lambda i: (0, 0)),         # skip weights resident
            pl.BlockSpec((hc, 1), lambda i: (0, 0)),            # skip bias resident
            pl.BlockSpec((feat, NODE_TILE), lambda i: (0, i)),  # node-feature tile
        ],
        out_specs=(pl.BlockSpec((3 * hc, NODE_TILE), lambda i: (0, i)),
                   pl.BlockSpec((hc, NODE_TILE), lambda i: (0, i))),
        compiler_params=pltpu.CompilerParams(
            dimension_semantics=("parallel",), vmem_limit_bytes=VMEM_LIMIT),
    )(wqkv, bqkv, wskip, bskip, xT)

    # no transposes / casts: Q, K, V all stay lane-dense (H, C, N) bf16.
    qkv3 = qkv.reshape(3, nheads, out_ch, n_pad)
    q, k, v = qkv3[0], qkv3[1], qkv3[2]
    skip = skip.reshape(nheads, out_ch, n_pad)
    we = p["we"].reshape(-1, nheads, out_ch)                    # (D, H, C) f32, resident
    ndim_e = we.shape[0]

    # ---- attention: grid = (dst tiles [parallel], src tiles [arbitrary, flash-style]) ----
    y = pl.pallas_call(
        _attn_kernel,
        out_shape=jax.ShapeDtypeStruct((nheads, out_ch, n_pad), jnp.float32),
        grid=(n_pad // DST_TILE, n_pad // SRC_TILE),
        in_specs=[
            pl.BlockSpec((nheads, out_ch, DST_TILE), lambda i, j: (0, 0, i)),   # q tile
            pl.BlockSpec((nheads, out_ch, SRC_TILE), lambda i, j: (0, 0, j)),   # k src tile
            pl.BlockSpec((nheads, out_ch, SRC_TILE), lambda i, j: (0, 0, j)),   # v src tile
            pl.BlockSpec((nheads, out_ch, DST_TILE), lambda i, j: (0, 0, i)),   # skip tile
            pl.BlockSpec((ndim_e, nheads, out_ch), lambda i, j: (0, 0, 0)),     # lin_edge W
            pl.BlockSpec((SRC_TILE, DST_TILE), lambda i, j: (j, i)),            # adjacency
            pl.BlockSpec((ndim_e, SRC_TILE, DST_TILE), lambda i, j: (0, j, i)),  # raw edge attrs
        ],
        out_specs=pl.BlockSpec((nheads, out_ch, DST_TILE), lambda i, j: (0, 0, i)),
        scratch_shapes=[
            pltpu.VMEM((nheads, 1, DST_TILE), jnp.float32),      # running max
            pltpu.VMEM((nheads, 1, DST_TILE), jnp.float32),      # running denom
            pltpu.VMEM((nheads, out_ch, DST_TILE), jnp.float32),  # running numerator
        ],
        compiler_params=pltpu.CompilerParams(
            dimension_semantics=("parallel", "arbitrary"),
            vmem_limit_bytes=VMEM_LIMIT),
    )(q, k, v, skip, we, adjT, eaT)
    return y.reshape(hc, n_pad)


def batchnorm_relu(yT, gamma, beta, n_real):
    """BatchNorm1d (training batch stats over the *real* nodes, eps=1e-5) + ReLU."""
    hc, n_pad = yT.shape
    # Two-pass BN: global stats over real nodes computed in JAX (tiny O(HC*N) reduction),
    # so the Pallas apply-kernel stays correct under node tiling / megacore splits.
    yr = yT[:, :n_real]
    mean = jnp.mean(yr, axis=1, keepdims=True)
    var = jnp.mean(jnp.square(yr - mean), axis=1, keepdims=True)
    scale = gamma * lax.rsqrt(var + 1e-5)
    shift = beta - mean * scale
    return pl.pallas_call(
        _bn_relu_kernel,
        out_shape=jax.ShapeDtypeStruct((hc, n_pad), jnp.float32),
        grid=(n_pad // NODE_TILE,),
        in_specs=[
            pl.BlockSpec((hc, NODE_TILE), lambda i: (0, i)),
            pl.BlockSpec((hc, 1), lambda i: (0, 0)),
            pl.BlockSpec((hc, 1), lambda i: (0, 0)),
        ],
        out_specs=pl.BlockSpec((hc, NODE_TILE), lambda i: (0, i)),
        compiler_params=pltpu.CompilerParams(
            dimension_semantics=("parallel",), vmem_limit_bytes=VMEM_LIMIT),
    )(yT, scale, shift)


def densify_edge_attrs(edge_index, edge_attr, n_pad):
    """Scatter RAW edge attributes once into bf16 kernel layout (D, src, dst) + bf16 adjacency.

    lin_edge is applied inside the attention kernel (factored form), so this tensor is built
    a single time and shared by all three layers, directly in bf16 and in kernel layout
    (no f32 O(N^2*HC) materialization, no transpose pass, no cast pass).
    """
    # TODO(synk): for large/sparse graphs replace with a per-dst-tile CSR gather
    # (PrefetchScalarGridSpec edge offsets + src indices) instead of any dense O(N^2) tensor.
    # NOTE: duplicate (src, dst) pairs overwrite instead of contributing separate softmax terms.
    src, dst = edge_index[0], edge_index[1]
    d = edge_attr.shape[1]
    eaT = jnp.zeros((d, n_pad, n_pad), jnp.bfloat16)
    eaT = eaT.at[:, src, dst].set(edge_attr.T.astype(jnp.bfloat16))         # (D, src, dst)
    adjT = jnp.zeros((n_pad, n_pad), jnp.bfloat16).at[src, dst].set(1.0)     # (src, dst)
    return adjT, eaT


# --------------------------------------------------------------------------------------
# Parameters / module
# --------------------------------------------------------------------------------------
def init_conv_params(key, in_dim, out_ch, nheads, edge_dim):
    hc = nheads * out_ch
    ks = jax.random.split(key, 9)

    def lin(k, i, o, scale=0.2):
        return jax.random.uniform(k, (i, o), jnp.float32, -scale, scale)

    # NOTE: biases use the same uniform range as weights (demo init, not torch's fan-in init).
    return dict(
        wq=lin(ks[0], in_dim, hc), bq=lin(ks[1], 1, hc),
        wk=lin(ks[2], in_dim, hc), bk=lin(ks[3], 1, hc),
        wv=lin(ks[4], in_dim, hc), bv=lin(ks[5], 1, hc),
        we=lin(ks[6], edge_dim, hc),                       # lin_edge (bias=False in PyG)
        wskip=lin(ks[7], in_dim, hc), bskip=lin(ks[8], 1, hc),
        gamma=jnp.ones((hc, 1), jnp.float32),              # BatchNorm affine defaults
        beta=jnp.zeros((hc, 1), jnp.float32),
    )


class GATBlockPallas:
    """Pallas port of GATblock: 3x (TransformerConv -> BatchNorm -> ReLU)."""

    def __init__(self, key, num_feat, nheads, hidden_dim, output_dim, num_edges):
        self.nheads, self.hidden_dim, self.output_dim = nheads, hidden_dim, output_dim
        k1, k2, k3 = jax.random.split(key, 3)
        self.conv1 = init_conv_params(k1, num_feat, hidden_dim, nheads, num_edges)
        self.conv2 = init_conv_params(k2, nheads * hidden_dim, output_dim, nheads, num_edges)
        self.conv3 = init_conv_params(k3, nheads * output_dim, output_dim, nheads, num_edges)

    def __call__(self, x, edge_index, edge_weigth):
        n, feat = x.shape
        tile = max(DST_TILE, SRC_TILE, NODE_TILE)
        n_pad = max(_round_up(n, tile), tile)
        # feature-major / node-minor layout end-to-end -> every Pallas output is lane-dense.
        xT = jnp.zeros((feat, n_pad), jnp.float32).at[:, :n].set(x.T)

        # raw edge attributes densified ONCE (bf16, kernel layout), shared by all 3 layers.
        adjT, eaT = densify_edge_attrs(edge_index, edge_weigth, n_pad)

        y1 = transformer_conv(xT, adjT, eaT, self.conv1, self.nheads, self.hidden_dim)
        x1T = batchnorm_relu(y1, self.conv1["gamma"], self.conv1["beta"], n)

        y2 = transformer_conv(x1T, adjT, eaT, self.conv2, self.nheads, self.output_dim)
        x2T = batchnorm_relu(y2, self.conv2["gamma"], self.conv2["beta"], n)

        y3 = transformer_conv(x2T, adjT, eaT, self.conv3, self.nheads, self.output_dim)
        x3T = batchnorm_relu(y3, self.conv3["gamma"], self.conv3["beta"], n)

        # return in the original node-major orientation, sliced to the real nodes
        return x1T[:, :n].T, x2T[:, :n].T, x3T[:, :n].T


if __name__ == "__main__":
    key = jax.random.PRNGKey(0)
    num_nodes, num_feat = 200, 4
    nheads, hidden_dim, output_dim, edge_dim = 2, 8, 8, 3

    kx, ke, kp = jax.random.split(key, 3)
    x = jax.random.normal(kx, (num_nodes, num_feat), jnp.float32)

    # deterministic connectivity: every node has 2 incoming edges (no duplicate pairs)
    dst = jnp.concatenate([jnp.arange(num_nodes), jnp.arange(num_nodes)])
    src = jnp.concatenate([(jnp.arange(num_nodes) + 1) % num_nodes,
                           (jnp.arange(num_nodes) + 7) % num_nodes])
    edge_index = jnp.stack([src, dst]).astype(jnp.int32)            # (2, 400)
    edge_weigth = jax.random.normal(ke, (edge_index.shape[1], edge_dim), jnp.float32)

    model = GATBlockPallas(kp, num_feat, nheads, hidden_dim, output_dim, edge_dim)
    x1, x2, x3 = model(x, edge_index, edge_weigth)
    jax.block_until_ready((x1, x2, x3))

    assert x1.shape == (num_nodes, nheads * hidden_dim)
    assert x2.shape == (num_nodes, nheads * output_dim)
    assert x3.shape == (num_nodes, nheads * output_dim)
    assert bool(jnp.all(jnp.isfinite(x1)))
    assert bool(jnp.all(jnp.isfinite(x2)))
    assert bool(jnp.all(jnp.isfinite(x3)))
    print("KERNEL_OK")
</pallas_src>

<mosaic_0001>
module attributes {stable_mosaic.version = 11 : i64} {
  func.func @_proj_kernel(%arg0: i32, %arg1: memref<48x4xbf16, #tpu.memory_space<vmem>>, %arg2: memref<48x1xf32, #tpu.memory_space<vmem>>, %arg3: memref<16x4xbf16, #tpu.memory_space<vmem>>, %arg4: memref<16x1xf32, #tpu.memory_space<vmem>>, %arg5: memref<4x128xf32, #tpu.memory_space<vmem>>, %arg6: memref<48x128xbf16, #tpu.memory_space<vmem>>, %arg7: memref<16x128xf32, #tpu.memory_space<vmem>>) attributes {dimension_semantics = [#tpu.dimension_semantics<parallel>], iteration_bounds = array<i64: 2>, scalar_prefetch = 0 : i64, scratch_operands = 0 : i64, tpu.core_type = #tpu.core_type<tc>, window_params = [{pipeline_mode = #tpu.pipeline_mode<synchronous>, transform_indices = @transform_0, window_bounds = array<i64: 48, 4>}, {pipeline_mode = #tpu.pipeline_mode<synchronous>, transform_indices = @transform_1, window_bounds = array<i64: 48, 1>}, {pipeline_mode = #tpu.pipeline_mode<synchronous>, transform_indices = @transform_2, window_bounds = array<i64: 16, 4>}, {pipeline_mode = #tpu.pipeline_mode<synchronous>, transform_indices = @transform_3, window_bounds = array<i64: 16, 1>}, {transform_indices = @transform_4, window_bounds = array<i64: 4, 128>}, {transform_indices = @transform_5, window_bounds = array<i64: 48, 128>}, {transform_indices = @transform_6, window_bounds = array<i64: 16, 128>}]} {
    %c0 = arith.constant 0 : index
    %c0_0 = arith.constant 0 : index
    %0 = vector.load %arg5[%c0, %c0_0] : memref<4x128xf32, #tpu.memory_space<vmem>>, vector<4x128xf32>
    %1 = arith.truncf %0 : vector<4x128xf32> to vector<4x128xbf16>
    %c0_1 = arith.constant 0 : index
    %c0_2 = arith.constant 0 : index
    %2 = vector.load %arg1[%c0_1, %c0_2] : memref<48x4xbf16, #tpu.memory_space<vmem>>, vector<48x4xbf16>
    %cst = arith.constant dense<0.000000e+00> : vector<48x128xf32>
    %3 = tpu.matmul %2, %1, %cst {dimension_numbers = #tpu.dot_dimension_numbers<[1], [0], [0], [1], [0, 0, 1, 1], [], []>} : vector<48x4xbf16>, vector<4x128xbf16>, vector<48x128xf32> -> vector<48x128xf32>
    %c0_3 = arith.constant 0 : index
    %c0_4 = arith.constant 0 : index
    %4 = vector.load %arg2[%c0_3, %c0_4] : memref<48x1xf32, #tpu.memory_space<vmem>>, vector<48x1xf32>
    %5 = vector.broadcast %4 : vector<48x1xf32> to vector<48x128xf32>
    %6 = arith.addf %3, %5 : vector<48x128xf32>
    %7 = arith.truncf %6 : vector<48x128xf32> to vector<48x128xbf16>
    %c0_5 = arith.constant 0 : index
    %c0_6 = arith.constant 0 : index
    %8 = vector.load %arg6[%c0_5, %c0_6] : memref<48x128xbf16, #tpu.memory_space<vmem>>, vector<48x128xbf16>
    tpu.vector_store %arg6[%c0_5, %c0_6], %7 {strides = array<i32>} : memref<48x128xbf16, #tpu.memory_space<vmem>>, vector<48x128xbf16>,
    %c0_7 = arith.constant 0 : index
    %c0_8 = arith.constant 0 : index
    %9 = vector.load %arg3[%c0_7, %c0_8] : memref<16x4xbf16, #tpu.memory_space<vmem>>, vector<16x4xbf16>
    %cst_9 = arith.constant dense<0.000000e+00> : vector<16x128xf32>
    %10 = tpu.matmul %9, %1, %cst_9 {dimension_numbers = #tpu.dot_dimension_numbers<[1], [0], [0], [1], [0, 0, 1, 1], [], []>} : vector<16x4xbf16>, vector<4x128xbf16>, vector<16x128xf32> -> vector<16x128xf32>
    %c0_10 = arith.constant 0 : index
    %c0_11 = arith.constant 0 : index
    %11 = vector.load %arg4[%c0_10, %c0_11] : memref<16x1xf32, #tpu.memory_space<vmem>>, vector<16x1xf32>
    %12 = vector.broadcast %11 : vector<16x1xf32> to vector<16x128xf32>
    %13 = arith.addf %10, %12 : vector<16x128xf32>
    %c0_12 = arith.constant 0 : index
    %c0_13 = arith.constant 0 : index
    %14 = vector.load %arg7[%c0_12, %c0_13] : memref<16x128xf32, #tpu.memory_space<vmem>>, vector<16x128xf32>
    tpu.vector_store %arg7[%c0_12, %c0_13], %13 {strides = array<i32>} : memref<16x128xf32, #tpu.memory_space<vmem>>, vector<16x128xf32>,
    return
  }
  func.func @transform_0(%arg0: i32) -> (i32, i32) {
    %c0_i32 = arith.constant 0 : i32
    %c0_i32_0 = arith.constant 0 : i32
    %c0_i32_1 = arith.constant 0 : i32
    return %c0_i32, %c0_i32_0 : i32, i32
  }
  func.func @transform_1(%arg0: i32) -> (i32, i32) {
    %c0_i32 = arith.constant 0 : i32
    %c0_i32_0 = arith.constant 0 : i32
    %c0_i32_1 = arith.constant 0 : i32
    return %c0_i32, %c0_i32_0 : i32, i32
  }
  func.func @transform_2(%arg0: i32) -> (i32, i32) {
    %c0_i32 = arith.constant 0 : i32
    %c0_i32_0 = arith.constant 0 : i32
    %c0_i32_1 = arith.constant 0 : i32
    return %c0_i32, %c0_i32_0 : i32, i32
  }
  func.func @transform_3(%arg0: i32) -> (i32, i32) {
    %c0_i32 = arith.constant 0 : i32
    %c0_i32_0 = arith.constant 0 : i32
    %c0_i32_1 = arith.constant 0 : i32
    return %c0_i32, %c0_i32_0 : i32, i32
  }
  func.func @transform_4(%arg0: i32) -> (i32, i32) {
    %c0_i32 = arith.constant 0 : i32
    %c0_i32_0 = arith.constant 0 : i32
    return %c0_i32, %arg0 : i32, i32
  }
  func.func @transform_5(%arg0: i32) -> (i32, i32) {
    %c0_i32 = arith.constant 0 : i32
    %c0_i32_0 = arith.constant 0 : i32
    return %c0_i32, %arg0 : i32, i32
  }
  func.func @transform_6(%arg0: i32) -> (i32, i32) {
    %c0_i32 = arith.constant 0 : i32
    %c0_i32_0 = arith.constant 0 : i32
    return %c0_i32, %arg0 : i32, i32
  }
}

</mosaic_0001>

<llo_original>
// kernel: tpu_custom_call.1
$region0: #{tpu_custom_call.1}
  #allocation0 [shape = 'u32[]', space=smem, size = 0x4, offset = 0x4, fixed_abs, tag = 'smem constant byte address 0x4 - core index']
  #allocation1 [shape = 'u32[144,128]{1,0:T(1,128)}', space=vmem, size = 0x12000, scoped, tag = 'internal scratch']
  %s0 = inlined_call_operand.vmem [shape: bf16[48,4], index: 0, kind: input, shape index: {}]
  %s1 = inlined_call_operand.vmem [shape: f32[48,1], index: 1, kind: input, shape index: {}]
  %s2 = inlined_call_operand.vmem [shape: bf16[16,4], index: 2, kind: input, shape index: {}]
  %s3 = inlined_call_operand.vmem [shape: f32[16,1], index: 3, kind: input, shape index: {}]
  %s4 = inlined_call_operand.vmem [shape: f32[4,256], index: 4, kind: input, shape index: {}]
  %s5 = inlined_call_operand.hbm [shape: bf16[48,256], index: 5, kind: output, shape index: {0}]
  %s6 = inlined_call_operand.hbm [shape: f32[16,256], index: 6, kind: output, shape index: {1}]
  %7 = xla_tuple %s5, %s6
  %s8 = sld [smem:[#allocation0]]
  $region61: #{tpu_custom_call.1} parent=0
    _
  %s10 = ssub.s32 1, %s8
  %s11 = scalar_select 0, %s10, %s8
  $region1: #{tpu_custom_call.1} parent=0
    #allocation2 [shape = 'u8[24576]{0}', space=vmem, size = 0x6000, scoped, tag = 'output window, operand 0']
    #allocation3 [shape = 's32[2]{0}', space=sflag, size = 0x8, scoped, tag = 'scoped memory for tpu_custom_call.1']
    #allocation4 [shape = 'u8[16384]{0}', space=vmem, size = 0x4000, scoped, tag = 'output window, operand 1']
    #allocation5 [shape = 's32[2]{0}', space=sflag, size = 0x8, scoped, tag = 'scoped memory for tpu_custom_call.1']
    %12 = vsyncpa [#allocation3], 0
    %s13 = scalar_lea.sflag [#allocation3], 1
    %14 = vsyncpa %s13, 0
    %15 = vsyncpa [#allocation5], 0
    %s16 = scalar_lea.sflag [#allocation5], 1
    %17 = vsyncpa %s16, 0
    loop: start=0, step=1, limit=4
    $region2: #{tpu_custom_call.1} parent=1 // loop_pre_header
      _
    $region3: #{tpu_custom_call.1} parent=1 // loop_header
      %s19 = sphi 0, %s23
      %p20 = scmp.ge.s32.totalorder %s19, 4
      %s27 = sphi 0, %s27
      %s29 = sphi 0, %s27
      %s30 = sphi 0, %s29
      %s44 = sphi 0, %s30
      %s48 = sphi 0, %s48
      %s50 = sphi 0, %s48
      %s51 = sphi 0, %s50
      %s65 = sphi 0, %s51
      %s69 = sphi 0, %s69
      %s71 = sphi 0, %s69
      %s72 = sphi 0, %s71
      %s86 = sphi 0, %s72
      %s90 = sphi 0, %s90
      %s92 = sphi 0, %s90
      %s93 = sphi 0, %s92
      %s107 = sphi 0, %s93
      %s113 = sphi 0, %s115
      %s116 = sphi 0, %s113
      %s117 = sphi 0, %s116
      %s133 = sphi 0, %s117
      %s139 = sphi 0, %s141
      %s142 = sphi 0, %s139
      %s143 = sphi 0, %s142
      %s159 = sphi 0, %s143
      %s165 = sphi 0, %s167
      %s168 = sphi 0, %s165
      %s169 = sphi 0, %s168
      %s185 = sphi 0, %s169
    $region4: #{tpu_custom_call.1} parent=1 // loop_header_branch
      %22 = sbr.rel (%p20) target = $region8
    $region5: #{tpu_custom_call.1} parent=1 // loop_body
      %s24 = ssub.s32 %s19, 1
      %s25 = ssub.s32 %s19, 2
      %s26 = sadd.s32 %s19, 1
      %s28 = sadd.s32 %s27, 1
      %p31 = scmp.eq.s32.totalorder %s19, 1
      %p32 = scmp.ne.s32.totalorder %s27, %s29
      %p33 = scmp.eq.s32.totalorder %s19, 0
      %p34 = por %p32, %p33
      %p35 = scmp.ne.s32.totalorder %s27, %s29
      %p36 = scmp.eq.s32.totalorder %s24, 1
      %p37 = por %p35, %p36
      %p38 = scmp.ne.s32.totalorder %s29, %s30
      %p39 = scmp.eq.s32.totalorder %s24, 0
      %p40 = por %p38, %p39
      %p41 = scmp.ne.s32.totalorder %s29, %s30
      %p42 = scmp.eq.s32.totalorder %s25, 1
      %p43 = por %p41, %p42
      %p45 = scmp.ne.s32.totalorder %s30, %s44
      %p46 = scmp.eq.s32.totalorder %s25, 0
      %p47 = por %p45, %p46
      %s49 = sadd.s32 %s48, 1
      %p52 = scmp.eq.s32.totalorder %s19, 1
      %p53 = scmp.ne.s32.totalorder %s48, %s50
      %p54 = scmp.eq.s32.totalorder %s19, 0
      %p55 = por %p53, %p54
      %p56 = scmp.ne.s32.totalorder %s48, %s50
      %p57 = scmp.eq.s32.totalorder %s24, 1
      %p58 = por %p56, %p57
      %p59 = scmp.ne.s32.totalorder %s50, %s51
      %p60 = scmp.eq.s32.totalorder %s24, 0
      %p61 = por %p59, %p60
      %p62 = scmp.ne.s32.totalorder %s50, %s51
      %p63 = scmp.eq.s32.totalorder %s25, 1
      %p64 = por %p62, %p63
      %p66 = scmp.ne.s32.totalorder %s51, %s65
      %p67 = scmp.eq.s32.totalorder %s25, 0
      %p68 = por %p66, %p67
      %s70 = sadd.s32 %s69, 1
      %p73 = scmp.eq.s32.totalorder %s19, 1
      %p74 = scmp.ne.s32.totalorder %s69, %s71
      %p75 = scmp.eq.s32.totalorder %s19, 0
      %p76 = por %p74, %p75
      %p77 = scmp.ne.s32.totalorder %s69, %s71
      %p78 = scmp.eq.s32.totalorder %s24, 1
      %p79 = por %p77, %p78
      %p80 = scmp.ne.s32.totalorder %s71, %s72
      %p81 = scmp.eq.s32.totalorder %s24, 0
      %p82 = por %p80, %p81
      %p83 = scmp.ne.s32.totalorder %s71, %s72
      %p84 = scmp.eq.s32.totalorder %s25, 1
      %p85 = por %p83, %p84
      %p87 = scmp.ne.s32.totalorder %s72, %s86
      %p88 = scmp.eq.s32.totalorder %s25, 0
      %p89 = por %p87, %p88
      %s91 = sadd.s32 %s90, 1
      %p94 = scmp.eq.s32.totalorder %s19, 1
      %p95 = scmp.ne.s32.totalorder %s90, %s92
      %p96 = scmp.eq.s32.totalorder %s19, 0
      %p97 = por %p95, %p96
      %p98 = scmp.ne.s32.totalorder %s90, %s92
      %p99 = scmp.eq.s32.totalorder %s24, 1
      %p100 = por %p98, %p99
      %p101 = scmp.ne.s32.totalorder %s92, %s93
      %p102 = scmp.eq.s32.totalorder %s24, 0
      %p103 = por %p101, %p102
      %p104 = scmp.ne.s32.totalorder %s92, %s93
      %p105 = scmp.eq.s32.totalorder %s25, 1
      %p106 = por %p104, %p105
      %p108 = scmp.ne.s32.totalorder %s93, %s107
      %p109 = scmp.eq.s32.totalorder %s25, 0
      %p110 = por %p108, %p109
      %s111 = ssub.s32 %s19, %s26
      %p112 = scmp.eq.s32.totalorder %s111, 0
      %s114 = sadd.s32 %s113, 1
      %s115 = scalar_select %p112, %s113, %s114
      %p118 = pneg %p112
      %p119 = scmp.eq.s32.totalorder %s19, 1
      %p120 = por %p118, %p119
      %p121 = scmp.ne.s32.totalorder %s113, %s116
      %p122 = scmp.eq.s32.totalorder %s19, 0
      %p123 = por %p121, %p122
      %p124 = scmp.ne.s32.totalorder %s113, %s116
      %p125 = scmp.eq.s32.totalorder %s24, 1
      %p126 = por %p124, %p125
      %p127 = scmp.ne.s32.totalorder %s116, %s117
      %p128 = scmp.eq.s32.totalorder %s24, 0
      %p129 = por %p127, %p128
      %p130 = scmp.ne.s32.totalorder %s116, %s117
      %p131 = scmp.eq.s32.totalorder %s25, 1
      %p132 = por %p130, %p131
      %p134 = scmp.ne.s32.totalorder %s117, %s133
      %p135 = scmp.eq.s32.totalorder %s25, 0
      %p136 = por %p134, %p135
      %s137 = ssub.s32 %s19, %s26
      %p138 = scmp.eq.s32.totalorder %s137, 0
      %s140 = sadd.s32 %s139, 1
      %s141 = scalar_select %p138, %s139, %s140
      %p144 = pneg %p138
      %p145 = scmp.eq.s32.totalorder %s19, 1
      %p146 = por %p144, %p145
      %p147 = scmp.ne.s32.totalorder %s139, %s142
      %p148 = scmp.eq.s32.totalorder %s19, 0
      %p149 = por %p147, %p148
      %p150 = scmp.ne.s32.totalorder %s139, %s142
      %p151 = scmp.eq.s32.totalorder %s24, 1
      %p152 = por %p150, %p151
      %p153 = scmp.ne.s32.totalorder %s142, %s143
      %p154 = scmp.eq.s32.totalorder %s24, 0
      %p155 = por %p153, %p154
      %p156 = scmp.ne.s32.totalorder %s142, %s143
      %p157 = scmp.eq.s32.totalorder %s25, 1
      %p158 = por %p156, %p157
      %p160 = scmp.ne.s32.totalorder %s143, %s159
      %p161 = scmp.eq.s32.totalorder %s25, 0
      %p162 = por %p160, %p161
      %s163 = ssub.s32 %s19, %s26
      %p164 = scmp.eq.s32.totalorder %s163, 0
      %s166 = sadd.s32 %s165, 1
      %s167 = scalar_select %p164, %s165, %s166
      %p170 = pneg %p164
      %p171 = scmp.eq.s32.totalorder %s19, 1
      %p172 = por %p170, %p171
      %p173 = scmp.ne.s32.totalorder %s165, %s168
      %p174 = scmp.eq.s32.totalorder %s19, 0
      %p175 = por %p173, %p174
      %p176 = scmp.ne.s32.totalorder %s165, %s168
      %p177 = scmp.eq.s32.totalorder %s24, 1
      %p178 = por %p176, %p177
      %p179 = scmp.ne.s32.totalorder %s168, %s169
      %p180 = scmp.eq.s32.totalorder %s24, 0
      %p181 = por %p179, %p180
      %p182 = scmp.ne.s32.totalorder %s168, %s169
      %p183 = scmp.eq.s32.totalorder %s25, 1
      %p184 = por %p182, %p183
      %p186 = scmp.ne.s32.totalorder %s169, %s185
      %p187 = scmp.eq.s32.totalorder %s25, 0
      %p188 = por %p186, %p187
      %p189 = scmp.le.s32.totalorder 1, %s19
      %p190 = scmp.lt.s32.totalorder %s19, 3
      %p191 = pnand %p189, %p190
      %p192 = pneg %p191
      // Predicated region
      $region9: #{tpu_custom_call.1} parent=5 // pred_check
        _
      $region10: #{tpu_custom_call.1} parent=5 // pred_check_branch
        %194 = sbr.rel (%p191) target = $region12
      $region11: #{tpu_custom_call.1} parent=5 // pred_region
        %s195 = ssub.s32 %s19, 1
        // Predicated region
        $region13: #{tpu_custom_call.1} parent=11 // pred_check
          %p196 = pneg %p40
        $region14: #{tpu_custom_call.1} parent=11 // pred_check_branch
          %198 = sbr.rel (%p196) target = $region16
        $region15: #{tpu_custom_call.1} parent=11 // pred_region
          _
        $region16: #{tpu_custom_call.1} parent=11 // pred_fallthru
          _
        // Predicated region
        $region17: #{tpu_custom_call.1} parent=11 // pred_check
          %p199 = pneg %p61
        $region18: #{tpu_custom_call.1} parent=11 // pred_check_branch
          %201 = sbr.rel (%p199) target = $region20
        $region19: #{tpu_custom_call.1} parent=11 // pred_region
          _
        $region20: #{tpu_custom_call.1} parent=11 // pred_fallthru
          _
        // Predicated region
        $region21: #{tpu_custom_call.1} parent=11 // pred_check
          %p202 = pneg %p82
        $region22: #{tpu_custom_call.1} parent=11 // pred_check_branch
          %204 = sbr.rel (%p202) target = $region24
        $region23: #{tpu_custom_call.1} parent=11 // pred_region
          _
        $region24: #{tpu_custom_call.1} parent=11 // pred_fallthru
          _
        // Predicated region
        $region25: #{tpu_custom_call.1} parent=11 // pred_check
          %p205 = pneg %p103
        $region26: #{tpu_custom_call.1} parent=11 // pred_check_branch
          %207 = sbr.rel (%p205) target = $region28
        $region27: #{tpu_custom_call.1} parent=11 // pred_region
          _
        $region28: #{tpu_custom_call.1} parent=11 // pred_fallthru
          _
      $region12: #{tpu_custom_call.1} parent=5 // pred_fallthru
        _
      %p208 = scmp.lt.s32.totalorder %s19, 2
      // Predicated region
      $region29: #{tpu_custom_call.1} parent=5 // pred_check
        %p209 = pneg %p208
      $region30: #{tpu_custom_call.1} parent=5 // pred_check_branch
        %211 = sbr.rel (%p209) target = $region32
      $region31: #{tpu_custom_call.1} parent=5 // pred_region
        // Predicated region
        $region33: #{tpu_custom_call.1} parent=31 // pred_check
          %p212 = pneg %p123
        $region34: #{tpu_custom_call.1} parent=31 // pred_check_branch
          %214 = sbr.rel (%p212) target = $region36
        $region35: #{tpu_custom_call.1} parent=31 // pred_region
          %p215 = scmp.lt.s32.totalorder %s19, 1
          %s216 = scalar_select %p215, %s19, 1
          %s217 = smul.addr %s216, 4
          %s218 = scalar_lea.vmem %s4, %s217
        $region36: #{tpu_custom_call.1} parent=31 // pred_fallthru
          _
      $region32: #{tpu_custom_call.1} parent=5 // pred_fallthru
        _
      %p219 = scmp.le.s32.totalorder 1, %s19
      %p220 = scmp.lt.s32.totalorder %s19, 3
      %p221 = pnand %p219, %p220
      %p222 = pneg %p221
      // Predicated region
      $region37: #{tpu_custom_call.1} parent=5 // pred_check
        _
      $region38: #{tpu_custom_call.1} parent=5 // pred_check_branch
        %224 = sbr.rel (%p221) target = $region40
      $region39: #{tpu_custom_call.1} parent=5 // pred_region
        %s225 = ssub.s32 %s19, 1
        %p226 = pneg %p40
        %p227 = pneg %p37
        %p228 = pneg %p61
        %p229 = pneg %p58
        %p230 = pneg %p82
        %p231 = pneg %p79
        %p232 = pneg %p103
        %p233 = pneg %p100
        %p234 = scmp.lt.s32.totalorder %s24, 1
        %s235 = scalar_select %p234, %s24, 1
        %s236 = smul.addr %s235, 4
        %s237 = scalar_lea.vmem %s4, %s236
        %p238 = pneg %p129
        %p239 = pneg %p126
        %p240 = pneg %p155
        %p241 = pneg %p152
        %s242 = sand.u32 %s142, 1
        %s243 = scalar_lea.sflag [#allocation3], %s242
        %s244 = sand.u32 %s142, 1
        %s245 = smul.addr %s244, 24
        %s246 = scalar_lea.vmem [#allocation2], %s245
        %p247 = pneg %p181
        %p248 = pneg %p178
        %s249 = sand.u32 %s168, 1
        %s250 = scalar_lea.sflag [#allocation5], %s249
        %s251 = sand.u32 %s168, 1
        %s252 = smul.addr %s251, 16
        %s253 = scalar_lea.vmem [#allocation4], %s252
        %p254 = scmp.lt.s32.totalorder %s24, 1
        %s255 = scalar_select %p254, %s24, 1
        %s256 = smul.addr %s255, 4
        %s257 = scalar_lea.vmem %s4, %s256
        %v259 = vld [vmem:[%s257] sm:$0xf]
        %v260 = vpack.c.bf16 %v259, %v259
        %v261 = vld [vmem:[%s0] sm:$0xf]
        %v262 = vld [vmem:[%s0 + $0x4] sm:$0xf]
        %v263 = vld [vmem:[%s0 + $0x8] sm:$0xf]
        %v264 = vld [vmem:[%s0 + $0xc] sm:$0xf]
        %v265 = vld [vmem:[%s0 + $0x10] sm:$0xf]
        %v266 = vld [vmem:[%s0 + $0x14] sm:$0xf]
        %v267 = vld [vmem:[%s1] sm:$0xff]
        %v268 = vld [vmem:[%s1 + $0x8] sm:$0xff]
        %v269 = vld [vmem:[%s1 + $0x10] sm:$0xff]
        %v270 = vld [vmem:[%s1 + $0x18] sm:$0xff]
        %v271 = vld [vmem:[%s1 + $0x20] sm:$0xff]
        %v272 = vld [vmem:[%s1 + $0x28] sm:$0xff]
        %274 = vset.pattern.permute.xlu0 0
        %275 = vperm.xlu0 %274, %v267
        %v276 = vpop.permute.xlu0 %275
        %279 = vset.pattern.permute.xlu0 0
        %280 = vperm.xlu0 %279, %v268
        %v281 = vpop.permute.xlu0 %280
        %284 = vset.pattern.permute.xlu0 0
        %285 = vperm.xlu0 %284, %v269
        %v286 = vpop.permute.xlu0 %285
        %289 = vset.pattern.permute.xlu0 0
        %290 = vperm.xlu0 %289, %v270
        %v291 = vpop.permute.xlu0 %290
        %294 = vset.pattern.permute.xlu0 0
        %295 = vperm.xlu0 %294, %v271
        %v296 = vpop.permute.xlu0 %295
        %299 = vset.pattern.permute.xlu0 0
        %300 = vperm.xlu0 %299, %v272
        %v301 = vpop.permute.xlu0 %300
        %v309 = vunpack.c.l.b16 %v261
        %v310 = vunpack.c.l.b16 %v262
        %v311 = vunpack.c.l.b16 %v263
        %v312 = vunpack.c.l.b16 %v264
        %v313 = vunpack.c.l.b16 %v265
        %v314 = vunpack.c.l.b16 %v266
        %v315 = vpack.c.b16 %v310, %v309
        %v316 = vpack.c.b16 %v312, %v311
        %v317 = vpack.c.b16 %v314, %v313
        %vm318 = vcmask 31744
        %v320 = vsel %vm318, %v315, 0
        %v323 = vsel %vm318, %v316, 0
        %v326 = vsel %vm318, %v317, 0
        %vm328 = vcmask 1041408
        %v330 = vsel %vm328, %v260, 0
        %332 = vmatprep.subr.bf16.mxu0 0
        %333 = vmatpush1.bf16.msra.mxu0 0
        %334 = vmatprep.subr.bf16.mxu0 0
        %335 = vmatpush1.bf16.msra.mxu0 0
        %336 = vmatprep.subr.bf16.mxu0 0
        %337 = vmatpush1.bf16.msra.mxu0 0
        %338 = vmatprep.subr.bf16.mxu0 0
        %339 = vmatpush1.bf16.msra.mxu0 0
        %340 = vmatprep.subr.bf16.mxu0 0
        %341 = vmatpush1.bf16.msra.mxu0 0
        %342 = vmatprep.subr.bf16.mxu0 0
        %343 = vmatpush1.bf16.msra.mxu0 0
        %344 = vmatprep.subr.bf16.mxu0 0
        %345 = vmatpush1.bf16.msra.mxu0 0
        %346 = vmatprep.subr.bf16.mxu0 0
        %347 = vmatpush1.bf16.msra.mxu0 %v330
        %348 = vmatprep.subr.bf16.mxu0 0
        %349 = vmatpush2.bf16.msra.mxu0 0
        %350 = vmatprep.subr.bf16.mxu0 0
        %351 = vmatpush2.bf16.msra.mxu0 0
        %352 = vmatprep.subr.bf16.mxu0 0
        %353 = vmatpush2.bf16.msra.mxu0 0
        %354 = vmatprep.subr.bf16.mxu0 0
        %355 = vmatpush2.bf16.msra.mxu0 0
        %356 = vmatprep.subr.bf16.mxu0 0
        %357 = vmatpush2.bf16.msra.mxu0 0
        %358 = vmatprep.subr.bf16.mxu0 0
        %359 = vmatpush2.bf16.msra.mxu0 0
        %360 = vmatprep.subr.bf16.mxu0 0
        %361 = vmatpush2.bf16.msra.mxu0 0
        %362 = vmatprep.subr.bf16.mxu0 0
        %363 = vmatpush2.bf16.msra.mxu0 0
        %364 = vmatprep.mubr.bf16.mxu0 0
        %365 = vmatmul.mubr.bf16.gmra.mxu0 %v320
        %v366 = vpop.f32.mrf.mxu0
        %v367 = vadd.f32 %v276, %v366
        %v368 = vpop.f32.mrf.mxu0
        %v369 = vpop.f32.mrf.mxu0
        %v370 = vadd.f32 %v281, %v369
        %v371 = vpop.f32.mrf.mxu0
        %372 = vmatprep.mubr.bf16.mxu0 0
        %373 = vmatmul.mubr.bf16.gmra.mxu0 %v323
        %v374 = vpop.f32.mrf.mxu0
        %v375 = vadd.f32 %v286, %v374
        %v376 = vpop.f32.mrf.mxu0
        %v377 = vpop.f32.mrf.mxu0
        %v378 = vadd.f32 %v291, %v377
        %v379 = vpop.f32.mrf.mxu0
        %380 = vmatprep.mubr.bf16.mxu0 0
        %381 = vmatmul.mubr.bf16.gmra.mxu0 %v326
        %v382 = vpop.f32.mrf.mxu0
        %v383 = vadd.f32 %v296, %v382
        %v384 = vpop.f32.mrf.mxu0
        %v385 = vpop.f32.mrf.mxu0
        %v386 = vadd.f32 %v301, %v385
        %v387 = vpop.f32.mrf.mxu0
        %388 = vdwg.mxu0
        %v389 = vpack.c.bf16 %v370, %v367
        %v390 = vpack.c.bf16 %v378, %v375
        %v391 = vpack.c.bf16 %v386, %v383
        %v395 = vunpack.c.l.b16 %v389
        %v396 = vunpack.c.h.b16 %v389
        %v397 = vunpack.c.l.b16 %v390
        %v398 = vunpack.c.h.b16 %v390
        %v399 = vunpack.c.l.b16 %v391
        %v400 = vunpack.c.h.b16 %v391
        %v401 = vpack.c.b16 %v395, %v395
        %v402 = vpack.c.b16 %v396, %v396
        %v403 = vpack.c.b16 %v397, %v397
        %v404 = vpack.c.b16 %v398, %v398
        %v405 = vpack.c.b16 %v399, %v399
        %v406 = vpack.c.b16 %v400, %v400
        %413 = vst [vmem:[%s246] sm:$0xf] %v401
        %414 = vst [vmem:[%s246 + $0x4] sm:$0xf] %v402
        %415 = vst [vmem:[%s246 + $0x8] sm:$0xf] %v403
        %416 = vst [vmem:[%s246 + $0xc] sm:$0xf] %v404
        %417 = vst [vmem:[%s246 + $0x10] sm:$0xf] %v405
        %418 = vst [vmem:[%s246 + $0x14] sm:$0xf] %v406
        %v419 = vld [vmem:[%s2] sm:$0xf]
        %v420 = vld [vmem:[%s2 + $0x4] sm:$0xf]
        %v421 = vld [vmem:[%s3] sm:$0xff]
        %v422 = vld [vmem:[%s3 + $0x8] sm:$0xff]
        %424 = vset.pattern.permute.xlu0 0
        %425 = vperm.xlu0 %424, %v421
        %v426 = vpop.permute.xlu0 %425
        %429 = vset.pattern.permute.xlu0 0
        %430 = vperm.xlu0 %429, %v422
        %v431 = vpop.permute.xlu0 %430
        %v435 = vunpack.c.l.b16 %v419
        %v436 = vunpack.c.l.b16 %v420
        %v437 = vpack.c.b16 %v436, %v435
        %v439 = vsel %vm318, %v437, 0
        %441 = vmatprep.subr.bf16.mxu0 0
        %442 = vmatpush1.bf16.msra.mxu0 0
        %443 = vmatprep.subr.bf16.mxu0 0
        %444 = vmatpush1.bf16.msra.mxu0 0
        %445 = vmatprep.subr.bf16.mxu0 0
        %446 = vmatpush1.bf16.msra.mxu0 0
        %447 = vmatprep.subr.bf16.mxu0 0
        %448 = vmatpush1.bf16.msra.mxu0 0
        %449 = vmatprep.subr.bf16.mxu0 0
        %450 = vmatpush1.bf16.msra.mxu0 0
        %451 = vmatprep.subr.bf16.mxu0 0
        %452 = vmatpush1.bf16.msra.mxu0 0
        %453 = vmatprep.subr.bf16.mxu0 0
        %454 = vmatpush1.bf16.msra.mxu0 0
        %455 = vmatprep.subr.bf16.mxu0 0
        %456 = vmatpush1.bf16.msra.mxu0 %v330
        %457 = vmatprep.subr.bf16.mxu0 0
        %458 = vmatpush2.bf16.msra.mxu0 0
        %459 = vmatprep.subr.bf16.mxu0 0
        %460 = vmatpush2.bf16.msra.mxu0 0
        %461 = vmatprep.subr.bf16.mxu0 0
        %462 = vmatpush2.bf16.msra.mxu0 0
        %463 = vmatprep.subr.bf16.mxu0 0
        %464 = vmatpush2.bf16.msra.mxu0 0
        %465 = vmatprep.subr.bf16.mxu0 0
        %466 = vmatpush2.bf16.msra.mxu0 0
        %467 = vmatprep.subr.bf16.mxu0 0
        %468 = vmatpush2.bf16.msra.mxu0 0
        %469 = vmatprep.subr.bf16.mxu0 0
        %470 = vmatpush2.bf16.msra.mxu0 0
        %471 = vmatprep.subr.bf16.mxu0 0
        %472 = vmatpush2.bf16.msra.mxu0 0
        %473 = vmatprep.mubr.bf16.mxu0 0
        %474 = vmatmul.mubr.bf16.gmra.mxu0 %v439
        %v475 = vpop.f32.mrf.mxu0
        %v476 = vadd.f32 %v426, %v475
        %v477 = vpop.f32.mrf.mxu0
        %v478 = vpop.f32.mrf.mxu0
        %v479 = vadd.f32 %v431, %v478
        %v480 = vpop.f32.mrf.mxu0
        %481 = vdwg.mxu0
        %482 = vst [vmem:[%s253] sm:$0xff] %v476
        %483 = vst [vmem:[%s253 + $0x8] sm:$0xff] %v479
        %s484 = sand.u32 %s142, 1
        %s485 = scalar_lea.sflag [#allocation3], %s484
        %s486 = sand.u32 %s142, 1
        %s487 = smul.addr %s486, 24
        %s488 = scalar_lea.vmem [#allocation2], %s487
        %s489 = sand.u32 %s168, 1
        %s490 = scalar_lea.sflag [#allocation5], %s489
        %s491 = sand.u32 %s168, 1
        %s492 = smul.addr %s491, 16
        %s493 = scalar_lea.vmem [#allocation4], %s492
        // Predicated region
        $region41: #{tpu_custom_call.1} parent=39 // pred_check
          %p494 = pneg %p152
        $region42: #{tpu_custom_call.1} parent=39 // pred_check_branch
          %496 = sbr.rel (%p494) target = $region44
        $region43: #{tpu_custom_call.1} parent=39 // pred_region
          %s498 = ssub.s32 384, 384
          %499 = vsyncadd %s485, %s498
          %s500 = smul.addr %s24, 64
          %s501 = scalar_lea.hbm %s5, %s500
          %s502 = sshll.u32 %s488, 4
          %s503 = int_to_ptr.vmem [resolvable:$true] %s502
          %508 = dma.vmem_to_hbm [thread:$0]  %s503, 384, %s501, %s485, 64, 128, 4
        $region44: #{tpu_custom_call.1} parent=39 // pred_fallthru
          _
        // Predicated region
        $region45: #{tpu_custom_call.1} parent=39 // pred_check
          %p509 = pneg %p178
        $region46: #{tpu_custom_call.1} parent=39 // pred_check_branch
          %511 = sbr.rel (%p509) target = $region48
        $region47: #{tpu_custom_call.1} parent=39 // pred_region
          %s513 = ssub.s32 256, 256
          %514 = vsyncadd %s490, %s513
          %s515 = smul.addr %s24, 128
          %s516 = scalar_lea.hbm %s6, %s515
          %s517 = sshll.u32 %s493, 4
          %s518 = int_to_ptr.vmem [resolvable:$true] %s517
          %523 = dma.vmem_to_hbm [thread:$0]  %s518, 256, %s516, %s490, 128, 256, 8
        $region48: #{tpu_custom_call.1} parent=39 // pred_fallthru
          _
      $region40: #{tpu_custom_call.1} parent=5 // pred_fallthru
        _
      %p524 = scmp.le.s32.totalorder 2, %s19
      // Predicated region
      $region49: #{tpu_custom_call.1} parent=5 // pred_check
        %p525 = pneg %p524
      $region50: #{tpu_custom_call.1} parent=5 // pred_check_branch
        %527 = sbr.rel (%p525) target = $region52
      $region51: #{tpu_custom_call.1} parent=5 // pred_region
        %s528 = ssub.s32 %s19, 2
        // Predicated region
        $region53: #{tpu_custom_call.1} parent=51 // pred_check
          %p529 = pneg %p158
        $region54: #{tpu_custom_call.1} parent=51 // pred_check_branch
          %531 = sbr.rel (%p529) target = $region56
        $region55: #{tpu_custom_call.1} parent=51 // pred_region
          %s532 = sand.u32 %s143, 1
          %s533 = scalar_lea.sflag [#allocation3], %s532
          %s534 = sand.u32 %s143, 1
          %s535 = smul.addr %s534, 24
          %s536 = scalar_lea.vmem [#allocation2], %s535
          %537 = dma.done %s533, 384
        $region56: #{tpu_custom_call.1} parent=51 // pred_fallthru
          _
        // Predicated region
        $region57: #{tpu_custom_call.1} parent=51 // pred_check
          %p538 = pneg %p184
        $region58: #{tpu_custom_call.1} parent=51 // pred_check_branch
          %540 = sbr.rel (%p538) target = $region60
        $region59: #{tpu_custom_call.1} parent=51 // pred_region
          %s541 = sand.u32 %s169, 1
          %s542 = scalar_lea.sflag [#allocation5], %s541
          %s543 = sand.u32 %s169, 1
          %s544 = smul.addr %s543, 16
          %s545 = scalar_lea.vmem [#allocation4], %s544
          %546 = dma.done %s542, 256
        $region60: #{tpu_custom_call.1} parent=51 // pred_fallthru
          _
      $region52: #{tpu_custom_call.1} parent=5 // pred_fallthru
        _
    $region6: #{tpu_custom_call.1} parent=1 // loop_footer
      %s23 = sadd.s32 1, %s19
    $region7: #{tpu_custom_call.1} parent=1 // loop_footer_branch
      %18 = sbr.rel target = $region3
    $region8: #{tpu_custom_call.1} parent=1 // loop_exit
      _
    %547 = vsyncpa [#allocation3], 1
    %s548 = scalar_lea.sflag [#allocation3], 1
    %549 = vsyncpa %s548, 1
    %550 = vsyncpa [#allocation5], 1
    %s551 = scalar_lea.sflag [#allocation5], 1
    %552 = vsyncpa %s551, 1

</llo_original>
